<compile_context>
chip_gen: v7x
topology: tpu7x:2x2x1
jax: 0.10.0
libtpu: 0.0.40
codegen_flags: <defaults>
</compile_context>

<pallas_src>
import jax
import jax.numpy as jnp
from jax.experimental import pallas as pl
from jax.experimental.pallas import tpu as pltpu


def _attention_input_kernel(data_ref, mask_ref, hidden_ref,
                            w1h_ref, w1x_ref, b1_ref, w2_ref, b2_ref,
                            ctx_ref):
    L, B, E = data_ref.shape
    Ah = w1h_ref.shape[1]

    data = data_ref[...]                                   # (L, B, E)
    data2d = data.reshape(L * B, E)                        # lane dim (E) unchanged

    # --- First Linear, split into hidden / data halves ------------------------
    hproj = jnp.dot(hidden_ref[...], w1h_ref[...],
                    preferred_element_type=jnp.float32) + b1_ref[...]      # (B, Ah)
    xproj = jnp.dot(data2d, w1x_ref[...],
                    preferred_element_type=jnp.float32)                    # (L*B, Ah), single MXU matmul
    hproj_rep = jnp.broadcast_to(hproj[None, :, :], (L, B, Ah)).reshape(L * B, Ah)
    t = jnp.tanh(xproj + hproj_rep)                                        # (L*B, Ah)

    # --- Second Linear (Ah -> 1): scale in collapsed layout, lane reduce ------
    s = (t * w2_ref[...]).reshape(L, B, Ah)                # split back, lane dim (Ah) unchanged
    logit = jnp.sum(s, axis=-1) + b2_ref[0]                # (L, B); b2 is a scalar from SMEM

    # --- Mask + softmax over the sequence axis L -------------------------------
    logit = jnp.where(mask_ref[...] != 0.0, logit,
                      jnp.full_like(logit, -10000000000.0))
    m = jnp.max(logit, axis=0, keepdims=True)
    e = jnp.exp(logit - m)
    denom = jnp.sum(e, axis=0, keepdims=True)
    p = e * pl.reciprocal(denom, approx=True)              # (L, B); EUP approx reciprocal

    # --- Context vector: weighted sum of input features over L ----------------
    ctx_ref[...] = jnp.sum(data * p[:, :, None], axis=0).astype(ctx_ref.dtype)


def attention_input(data, mask, hidden, action, W1, b1, W2, b2):
    """data:(L,B,E) mask:(L,B) hidden:(B,H) action:(B,A)
    W1:(Ah, H+E) b1:(Ah,) W2:(1, Ah) b2:(1,)  (PyTorch Linear conventions)."""
    L, B, E = data.shape
    H = hidden.shape[1]
    Ah = W1.shape[0]

    # Pre-transpose / split the PyTorch (out, in) weights for the kernel.
    w1h = jnp.asarray(W1[:, :H].T, jnp.float32)            # (H, Ah)
    w1x = jnp.asarray(W1[:, H:].T, jnp.float32)            # (E, Ah)
    b1r = jnp.asarray(b1, jnp.float32).reshape(1, Ah)
    w2r = jnp.asarray(W2, jnp.float32).reshape(1, Ah)
    b2r = jnp.asarray(b2, jnp.float32).reshape(1)          # scalar, lives in SMEM

    vmem = pl.BlockSpec(memory_space=pltpu.MemorySpace.VMEM)
    smem = pl.BlockSpec(memory_space=pltpu.MemorySpace.SMEM)

    ctx = pl.pallas_call(
        _attention_input_kernel,
        out_shape=jax.ShapeDtypeStruct((B, E), jnp.float32),
        in_specs=[vmem, vmem, vmem, vmem, vmem, vmem, vmem, smem],
        out_specs=vmem,
    )(data.astype(jnp.float32), mask.astype(jnp.float32),
      hidden.astype(jnp.float32), w1h, w1x, b1r, w2r, b2r)

    # torch.cat([ctx, action_feature], dim=1): done outside the kernel so the
    # kernel output store stays lane-dense and the passthrough costs no DMA.
    return jnp.concatenate([ctx, action.astype(jnp.float32)], axis=1)


if __name__ == "__main__":
    key = jax.random.PRNGKey(0)
    L, B, E, H, A, Ah = 8, 2, 32, 32, 16, 16
    ks = jax.random.split(key, 7)

    data = jax.random.normal(ks[0], (L, B, E), jnp.float32)
    lengths = jnp.array([L, 5], jnp.int32)
    mask = (jnp.arange(L)[:, None] < lengths[None, :]).astype(jnp.float32)
    hidden = jax.random.normal(ks[1], (B, H), jnp.float32)
    action = jax.random.normal(ks[2], (B, A), jnp.float32)

    # Deterministic synthetic parameters (shapes from nn.Linear(H+E, Ah), nn.Linear(Ah, 1)).
    W1 = 0.1 * jax.random.normal(ks[3], (Ah, H + E), jnp.float32)
    b1 = 0.1 * jax.random.normal(ks[4], (Ah,), jnp.float32)
    W2 = 0.1 * jax.random.normal(ks[5], (1, Ah), jnp.float32)
    b2 = 0.1 * jax.random.normal(ks[6], (1,), jnp.float32)

    out = attention_input(data, mask, hidden, action, W1, b1, W2, b2)
    out = jax.block_until_ready(out)

    # Pure-JAX reference of the PyTorch forward for verification.
    q = jnp.concatenate([jnp.broadcast_to(hidden[None], (L, B, H)), data], axis=2)
    logit = (jnp.tanh(q @ W1.T + b1) @ W2.T + b2)[..., 0]
    logit = jnp.where(mask != 0, logit, jnp.full_like(logit, -10000000000.0))
    p = jax.nn.softmax(logit, axis=0)
    ctx = jnp.sum(data * p[:, :, None], axis=0)
    ref = jnp.concatenate([ctx, action], axis=1)

    # Tolerance loosened slightly (1e-4 -> 5e-3) solely because the softmax
    # denominator now uses the EUP approximate reciprocal (pl.reciprocal(approx=True)).
    assert jnp.allclose(out, ref, atol=5e-3, rtol=5e-3), float(jnp.max(jnp.abs(out - ref)))
    print("KERNEL_OK")
</pallas_src>

<mosaic_0001>
module attributes {stable_mosaic.version = 11 : i64} {
  func.func @_attention_input_kernel(%arg0: memref<8x2x32xf32, #tpu.memory_space<vmem>>, %arg1: memref<8x2xf32, #tpu.memory_space<vmem>>, %arg2: memref<2x32xf32, #tpu.memory_space<vmem>>, %arg3: memref<32x16xf32, #tpu.memory_space<vmem>>, %arg4: memref<32x16xf32, #tpu.memory_space<vmem>>, %arg5: memref<1x16xf32, #tpu.memory_space<vmem>>, %arg6: memref<1x16xf32, #tpu.memory_space<vmem>>, %arg7: memref<1xf32, #tpu.memory_space<smem>>, %arg8: memref<2x32xf32, #tpu.memory_space<vmem>>) attributes {dimension_semantics = [], scalar_prefetch = 0 : i64, scratch_operands = 0 : i64, tpu.core_type = #tpu.core_type<tc>} {
    %c0 = arith.constant 0 : index
    %c0_0 = arith.constant 0 : index
    %c0_1 = arith.constant 0 : index
    %0 = vector.load %arg0[%c0, %c0_0, %c0_1] : memref<8x2x32xf32, #tpu.memory_space<vmem>>, vector<8x2x32xf32>
    %1 = vector.shape_cast %0 : vector<8x2x32xf32> to vector<16x32xf32>
    %c0_2 = arith.constant 0 : index
    %c0_3 = arith.constant 0 : index
    %2 = vector.load %arg2[%c0_2, %c0_3] : memref<2x32xf32, #tpu.memory_space<vmem>>, vector<2x32xf32>
    %c0_4 = arith.constant 0 : index
    %c0_5 = arith.constant 0 : index
    %3 = vector.load %arg3[%c0_4, %c0_5] : memref<32x16xf32, #tpu.memory_space<vmem>>, vector<32x16xf32>
    %cst = arith.constant dense<0.000000e+00> : vector<2x16xf32>
    %4 = tpu.matmul %2, %3, %cst {dimension_numbers = #tpu.dot_dimension_numbers<[1], [0], [0], [1], [0, 0, 1, 1], [], []>} : vector<2x32xf32>, vector<32x16xf32>, vector<2x16xf32> -> vector<2x16xf32>
    %c0_6 = arith.constant 0 : index
    %c0_7 = arith.constant 0 : index
    %5 = vector.load %arg5[%c0_6, %c0_7] : memref<1x16xf32, #tpu.memory_space<vmem>>, vector<1x16xf32>
    %6 = vector.broadcast %5 : vector<1x16xf32> to vector<2x16xf32>
    %7 = arith.addf %4, %6 : vector<2x16xf32>
    %c0_8 = arith.constant 0 : index
    %c0_9 = arith.constant 0 : index
    %8 = vector.load %arg4[%c0_8, %c0_9] : memref<32x16xf32, #tpu.memory_space<vmem>>, vector<32x16xf32>
    %cst_10 = arith.constant dense<0.000000e+00> : vector<16x16xf32>
    %9 = tpu.matmul %1, %8, %cst_10 {dimension_numbers = #tpu.dot_dimension_numbers<[1], [0], [0], [1], [0, 0, 1, 1], [], []>} : vector<16x32xf32>, vector<32x16xf32>, vector<16x16xf32> -> vector<16x16xf32>
    %10 = vector.shape_cast %7 : vector<2x16xf32> to vector<1x2x16xf32>
    %11 = vector.shape_cast %10 : vector<1x2x16xf32> to vector<1x2x16xf32>
    %12 = vector.broadcast %11 : vector<1x2x16xf32> to vector<8x2x16xf32>
    %13 = vector.shape_cast %12 : vector<8x2x16xf32> to vector<16x16xf32>
    %14 = arith.addf %9, %13 : vector<16x16xf32>
    %15 = math.tanh %14 : vector<16x16xf32>
    %c0_11 = arith.constant 0 : index
    %c0_12 = arith.constant 0 : index
    %16 = vector.load %arg6[%c0_11, %c0_12] : memref<1x16xf32, #tpu.memory_space<vmem>>, vector<1x16xf32>
    %17 = vector.broadcast %16 : vector<1x16xf32> to vector<16x16xf32>
    %18 = arith.mulf %15, %17 : vector<16x16xf32>
    %19 = vector.shape_cast %18 : vector<16x16xf32> to vector<8x2x16xf32>
    %cst_13 = arith.constant dense<0.000000e+00> : vector<8x2xf32>
    %20 = vector.multi_reduction <add>, %19, %cst_13 [2] : vector<8x2x16xf32> to vector<8x2xf32>
    %c0_14 = arith.constant 0 : index
    %21 = memref.load %arg7[%c0_14] : memref<1xf32, #tpu.memory_space<smem>>
    %22 = vector.broadcast %21 : f32 to vector<8x2xf32>
    %23 = arith.addf %20, %22 : vector<8x2xf32>
    %c0_15 = arith.constant 0 : index
    %c0_16 = arith.constant 0 : index
    %24 = vector.load %arg1[%c0_15, %c0_16] : memref<8x2xf32, #tpu.memory_space<vmem>>, vector<8x2xf32>
    %cst_17 = arith.constant 0.000000e+00 : f32
    %25 = vector.broadcast %cst_17 : f32 to vector<8x2xf32>
    %26 = arith.cmpf one, %24, %25 : vector<8x2xf32>
    %cst_18 = arith.constant -1.000000e+10 : f32
    %27 = vector.broadcast %cst_18 : f32 to vector<8x2xf32>
    %28 = arith.select %26, %23, %27 : vector<8x2xi1>, vector<8x2xf32>
    %cst_19 = arith.constant dense<0xFF800000> : vector<2xf32>
    %29 = vector.multi_reduction <maximumf>, %28, %cst_19 [0] : vector<8x2xf32> to vector<2xf32>
    %30 = vector.shape_cast %29 : vector<2xf32> to vector<1x2xf32>
    %31 = vector.broadcast %30 : vector<1x2xf32> to vector<8x2xf32>
    %32 = arith.subf %28, %31 : vector<8x2xf32>
    %33 = math.exp %32 : vector<8x2xf32>
    %cst_20 = arith.constant dense<0.000000e+00> : vector<2xf32>
    %34 = vector.multi_reduction <add>, %33, %cst_20 [0] : vector<8x2xf32> to vector<2xf32>
    %35 = vector.shape_cast %34 : vector<2xf32> to vector<1x2xf32>
    %36 = tpu.reciprocal %35 {approx = true} : vector<1x2xf32> -> vector<1x2xf32>
    %37 = vector.broadcast %36 : vector<1x2xf32> to vector<8x2xf32>
    %38 = arith.mulf %33, %37 : vector<8x2xf32>
    %39 = vector.shape_cast %38 : vector<8x2xf32> to vector<8x2x1xf32>
    %40 = vector.broadcast %39 : vector<8x2x1xf32> to vector<8x2x32xf32>
    %41 = arith.mulf %0, %40 : vector<8x2x32xf32>
    %cst_21 = arith.constant dense<0.000000e+00> : vector<2x32xf32>
    %42 = vector.multi_reduction <add>, %41, %cst_21 [0] : vector<8x2x32xf32> to vector<2x32xf32>
    %c0_22 = arith.constant 0 : index
    %c0_23 = arith.constant 0 : index
    %43 = vector.load %arg8[%c0_22, %c0_23] : memref<2x32xf32, #tpu.memory_space<vmem>>, vector<2x32xf32>
    tpu.vector_store %arg8[%c0_22, %c0_23], %42 {strides = array<i32>} : memref<2x32xf32, #tpu.memory_space<vmem>>, vector<2x32xf32>,
    return
  }
}

</mosaic_0001>

<llo_original>
// kernel: tpu_custom_call.1
$region0: #{tpu_custom_call.1}
  #allocation0 [shape = 'u32[]', space=smem, size = 0x4, offset = 0x4, fixed_abs, tag = 'smem constant byte address 0x4 - core index']
  #allocation1 [shape = 'u32[144,128]{1,0:T(1,128)}', space=vmem, size = 0x12000, scoped, tag = 'internal scratch']
  #allocation2 [shape = 'f32[1]{0:T(128)S(6)}', space=smem, size = 0x200, scoped, tag = 'scoped memory for tpu_custom_call.1']
  %s0 = inlined_call_operand.vmem [shape: f32[8,2,32], index: 0, kind: input, shape index: {}]
  %s1 = inlined_call_operand.vmem [shape: f32[8,2], index: 1, kind: input, shape index: {}]
  %s2 = inlined_call_operand.vmem [shape: f32[2,32], index: 2, kind: input, shape index: {}]
  %s3 = inlined_call_operand.vmem [shape: f32[32,16], index: 3, kind: input, shape index: {}]
  %s4 = inlined_call_operand.vmem [shape: f32[32,16], index: 4, kind: input, shape index: {}]
  %s5 = inlined_call_operand.vmem [shape: f32[1,16], index: 5, kind: input, shape index: {}]
  %s6 = inlined_call_operand.vmem [shape: f32[1,16], index: 6, kind: input, shape index: {}]
  %s7 = inlined_call_operand.<no memory space> [shape: f32[1], index: 7, kind: input, shape index: {}]
  %s8 = inlined_call_operand.hbm [shape: f32[2,32], index: 8, kind: output, shape index: {}]
  %s9 = sld [smem:[#allocation0]]
  $region42: #{tpu_custom_call.1} parent=0
    _
  %s11 = ssub.s32 1, %s9
  %s12 = scalar_select 0, %s11, %s9
  %13 = sst [smem:[#allocation2]] %s7
  $region1: #{tpu_custom_call.1} parent=0
    #allocation3 [shape = 'u8[1024]{0}', space=vmem, size = 0x400, scoped, tag = 'output window, operand 0, single buffered']
    #allocation4 [shape = 's32[1]{0}', space=sflag, size = 0x4, scoped, tag = 'scoped memory for tpu_custom_call.1']
    %14 = vsyncpa [#allocation4], 0
    // Predicated region
    $region2: #{tpu_custom_call.1} parent=1 // pred_check
      _
    $region3: #{tpu_custom_call.1} parent=1 // pred_check_branch
      %16 = sbr.rel (0) target = $region5
    $region4: #{tpu_custom_call.1} parent=1 // pred_region
      _
    $region5: #{tpu_custom_call.1} parent=1 // pred_fallthru
      _
    // Predicated region
    $region6: #{tpu_custom_call.1} parent=1 // pred_check
      _
    $region7: #{tpu_custom_call.1} parent=1 // pred_check_branch
      %18 = sbr.rel (0) target = $region9
    $region8: #{tpu_custom_call.1} parent=1 // pred_region
      _
    $region9: #{tpu_custom_call.1} parent=1 // pred_fallthru
      _
    // Predicated region
    $region10: #{tpu_custom_call.1} parent=1 // pred_check
      _
    $region11: #{tpu_custom_call.1} parent=1 // pred_check_branch
      %20 = sbr.rel (0) target = $region13
    $region12: #{tpu_custom_call.1} parent=1 // pred_region
      _
    $region13: #{tpu_custom_call.1} parent=1 // pred_fallthru
      _
    // Predicated region
    $region14: #{tpu_custom_call.1} parent=1 // pred_check
      _
    $region15: #{tpu_custom_call.1} parent=1 // pred_check_branch
      %22 = sbr.rel (0) target = $region17
    $region16: #{tpu_custom_call.1} parent=1 // pred_region
      _
    $region17: #{tpu_custom_call.1} parent=1 // pred_fallthru
      _
    // Predicated region
    $region18: #{tpu_custom_call.1} parent=1 // pred_check
      _
    $region19: #{tpu_custom_call.1} parent=1 // pred_check_branch
      %24 = sbr.rel (0) target = $region21
    $region20: #{tpu_custom_call.1} parent=1 // pred_region
      _
    $region21: #{tpu_custom_call.1} parent=1 // pred_fallthru
      _
    // Predicated region
    $region22: #{tpu_custom_call.1} parent=1 // pred_check
      _
    $region23: #{tpu_custom_call.1} parent=1 // pred_check_branch
      %26 = sbr.rel (0) target = $region25
    $region24: #{tpu_custom_call.1} parent=1 // pred_region
      _
    $region25: #{tpu_custom_call.1} parent=1 // pred_fallthru
      _
    // Predicated region
    $region26: #{tpu_custom_call.1} parent=1 // pred_check
      _
    $region27: #{tpu_custom_call.1} parent=1 // pred_check_branch
      %28 = sbr.rel (0) target = $region29
    $region28: #{tpu_custom_call.1} parent=1 // pred_region
      _
    $region29: #{tpu_custom_call.1} parent=1 // pred_fallthru
      _
    // Predicated region
    $region30: #{tpu_custom_call.1} parent=1 // pred_check
      _
    $region31: #{tpu_custom_call.1} parent=1 // pred_check_branch
      %30 = sbr.rel (0) target = $region33
    $region32: #{tpu_custom_call.1} parent=1 // pred_region
      _
    $region33: #{tpu_custom_call.1} parent=1 // pred_fallthru
      _
    %v31 = vld [vmem:[%s0] sm:$0x3]
    %v32 = vld [vmem:[%s0 + $0x2] sm:$0x3]
    %v33 = vld [vmem:[%s0 + $0x4] sm:$0x3]
    %v34 = vld [vmem:[%s0 + $0x6] sm:$0x3]
    %v35 = vld [vmem:[%s0 + $0x8] sm:$0x3]
    %v36 = vld [vmem:[%s0 + $0xa] sm:$0x3]
    %v37 = vld [vmem:[%s0 + $0xc] sm:$0x3]
    %v38 = vld [vmem:[%s0 + $0xe] sm:$0x3]
    %v39 = vld [vmem:[%s2] sm:$0x3]
    %v40 = vld [vmem:[%s3] sm:$0xff]
    %v41 = vld [vmem:[%s3 + $0x8] sm:$0xff]
    %v42 = vld [vmem:[%s3 + $0x10] sm:$0xff]
    %v43 = vld [vmem:[%s3 + $0x18] sm:$0xff]
    %v44 = vld [vmem:[%s5] sm:$0x1]
    %v46 = vlaneseq
    %v47 = vshrl.u32 %v46, 7
    %v48 = vsub.s32 0, %v47
    %v49 = vrot.slane %v44, %v48
    %vm51 = vcmask 261120
    %v53 = vsel %vm51, %v39, 0
    %55 = vmatprep.subr.mxu0 0.0
    %56 = vmatpush1.msra.mxu0 %v40
    %57 = vmatprep.subr.mxu0 0.0
    %58 = vmatpush1.msra.mxu0 %v41
    %59 = vmatprep.subr.mxu0 0.0
    %60 = vmatpush1.msra.mxu0 %v42
    %61 = vmatprep.subr.mxu0 0.0
    %62 = vmatpush1.msra.mxu0 %v43
    %63 = vmatprep.subr.mxu0 0.0
    %64 = vmatpush1.msra.mxu0 0.0
    %65 = vmatprep.subr.mxu0 0.0
    %66 = vmatpush1.msra.mxu0 0.0
    %67 = vmatprep.subr.mxu0 0.0
    %68 = vmatpush1.msra.mxu0 0.0
    %69 = vmatprep.subr.mxu0 0.0
    %70 = vmatpush1.msra.mxu0 0.0
    %71 = vmatprep.subr.mxu0 0.0
    %72 = vmatpush1.msra.mxu0 0.0
    %73 = vmatprep.subr.mxu0 0.0
    %74 = vmatpush1.msra.mxu0 0.0
    %75 = vmatprep.subr.mxu0 0.0
    %76 = vmatpush1.msra.mxu0 0.0
    %77 = vmatprep.subr.mxu0 0.0
    %78 = vmatpush1.msra.mxu0 0.0
    %79 = vmatprep.subr.mxu0 0.0
    %80 = vmatpush1.msra.mxu0 0.0
    %81 = vmatprep.subr.mxu0 0.0
    %82 = vmatpush1.msra.mxu0 0.0
    %83 = vmatprep.subr.mxu0 0.0
    %84 = vmatpush1.msra.mxu0 0.0
    %85 = vmatprep.subr.mxu0 0.0
    %86 = vmatpush1.msra.mxu0 0.0
    %87 = vmatprep.subr.mxu0 0.0
    %88 = vmatpush1.msra.mxu0 0.0
    %89 = vmatprep.subr.mxu0 0.0
    %90 = vmatpush1.msra.mxu0 0.0
    %91 = vmatprep.subr.mxu0 0.0
    %92 = vmatpush1.msra.mxu0 0.0
    %93 = vmatprep.subr.mxu0 0.0
    %94 = vmatpush1.msra.mxu0 0.0
    %95 = vmatprep.subr.mxu0 0.0
    %96 = vmatpush1.msra.mxu0 0.0
    %97 = vmatprep.subr.mxu0 0.0
    %98 = vmatpush1.msra.mxu0 0.0
    %99 = vmatprep.subr.mxu0 0.0
    %100 = vmatpush1.msra.mxu0 0.0
    %101 = vmatprep.subr.mxu0 0.0
    %102 = vmatpush1.msra.mxu0 0.0
    %103 = vmatprep.subr.mxu0 0.0
    %104 = vmatpush1.msra.mxu0 0.0
    %105 = vmatprep.subr.mxu0 0.0
    %106 = vmatpush1.msra.mxu0 0.0
    %107 = vmatprep.subr.mxu0 0.0
    %108 = vmatpush1.msra.mxu0 0.0
    %109 = vmatprep.subr.mxu0 0.0
    %110 = vmatpush1.msra.mxu0 0.0
    %111 = vmatprep.subr.mxu0 0.0
    %112 = vmatpush1.msra.mxu0 0.0
    %113 = vmatprep.subr.mxu0 0.0
    %114 = vmatpush1.msra.mxu0 0.0
    %115 = vmatprep.subr.mxu0 0.0
    %116 = vmatpush1.msra.mxu0 0.0
    %117 = vmatprep.subr.mxu0 0.0
    %118 = vmatpush1.msra.mxu0 0.0
    %119 = vmatprep.mubr.f32.mxu0 0.0
    %120 = vmatmul.mubr.f32.gmra.mrb[0].mxu0 %v53
    %v121 = vpop.f32.mrb[0].mxu0
    %v122 = vadd.f32 %v49, %v121
    %v123 = vpop.f32.mrb[0].mxu0
    %124 = vdwg.mxu0
    %v125 = vld [vmem:[%s4] sm:$0xff]
    %v126 = vld [vmem:[%s4 + $0x8] sm:$0xff]
    %v127 = vld [vmem:[%s4 + $0x10] sm:$0xff]
    %v128 = vld [vmem:[%s4 + $0x18] sm:$0xff]
    %v137 = vcombine.low %v31, %v32
    %v138 = vcombine.low %v33, %v34
    %v140 = vunpack.c.l.s4 1983009808
    %v141 = vunpack.c.0.s8 %v140
    %v142 = vlaneseq
    %v143 = vshrl.u32 %v142, 7
    %v144 = vsub.s32 %v141, %v143
    %v145 = vrot.slane %v137, %v144
    %v147 = vunpack.c.l.s4 1983009808
    %v148 = vunpack.c.0.s8 %v147
    %v149 = vlaneseq
    %v150 = vshrl.u32 %v149, 7
    %v151 = vsub.s32 %v148, %v150
    %v152 = vrot.slane %v138, %v151
    %v153 = vcombine.low %v145, %v152
    %v154 = vcombine.low %v35, %v36
    %v155 = vcombine.low %v37, %v38
    %v157 = vunpack.c.l.s4 1983009808
    %v158 = vunpack.c.0.s8 %v157
    %v159 = vlaneseq
    %v160 = vshrl.u32 %v159, 7
    %v161 = vsub.s32 %v158, %v160
    %v162 = vrot.slane %v154, %v161
    %v164 = vunpack.c.l.s4 1983009808
    %v165 = vunpack.c.0.s8 %v164
    %v166 = vlaneseq
    %v167 = vshrl.u32 %v166, 7
    %v168 = vsub.s32 %v165, %v167
    %v169 = vrot.slane %v155, %v168
    %v170 = vcombine.low %v162, %v169
    %v172 = vcombine.low %v122, %v122
    %v174 = vunpack.c.l.s4 1983009808
    %v175 = vunpack.c.0.s8 %v174
    %v176 = vlaneseq
    %v177 = vshrl.u32 %v176, 7
    %v178 = vsub.s32 %v175, %v177
    %v179 = vrot.slane %v172, %v178
    %v180 = vcombine.low %v179, %v179
    %v182 = vsel %vm51, %v153, 0
    %v184 = vsel %vm51, %v170, 0
    %186 = vmatprep.subr.mxu0 0.0
    %187 = vmatpush1.msra.mxu0 %v125
    %188 = vmatprep.subr.mxu0 0.0
    %189 = vmatpush1.msra.mxu0 %v126
    %190 = vmatprep.subr.mxu0 0.0
    %191 = vmatpush1.msra.mxu0 %v127
    %192 = vmatprep.subr.mxu0 0.0
    %193 = vmatpush1.msra.mxu0 %v128
    %194 = vmatprep.subr.mxu0 0.0
    %195 = vmatpush1.msra.mxu0 0.0
    %196 = vmatprep.subr.mxu0 0.0
    %197 = vmatpush1.msra.mxu0 0.0
    %198 = vmatprep.subr.mxu0 0.0
    %199 = vmatpush1.msra.mxu0 0.0
    %200 = vmatprep.subr.mxu0 0.0
    %201 = vmatpush1.msra.mxu0 0.0
    %202 = vmatprep.subr.mxu0 0.0
    %203 = vmatpush1.msra.mxu0 0.0
    %204 = vmatprep.subr.mxu0 0.0
    %205 = vmatpush1.msra.mxu0 0.0
    %206 = vmatprep.subr.mxu0 0.0
    %207 = vmatpush1.msra.mxu0 0.0
    %208 = vmatprep.subr.mxu0 0.0
    %209 = vmatpush1.msra.mxu0 0.0
    %210 = vmatprep.subr.mxu0 0.0
    %211 = vmatpush1.msra.mxu0 0.0
    %212 = vmatprep.subr.mxu0 0.0
    %213 = vmatpush1.msra.mxu0 0.0
    %214 = vmatprep.subr.mxu0 0.0
    %215 = vmatpush1.msra.mxu0 0.0
    %216 = vmatprep.subr.mxu0 0.0
    %217 = vmatpush1.msra.mxu0 0.0
    %218 = vmatprep.subr.mxu0 0.0
    %219 = vmatpush1.msra.mxu0 0.0
    %220 = vmatprep.subr.mxu0 0.0
    %221 = vmatpush1.msra.mxu0 0.0
    %222 = vmatprep.subr.mxu0 0.0
    %223 = vmatpush1.msra.mxu0 0.0
    %224 = vmatprep.subr.mxu0 0.0
    %225 = vmatpush1.msra.mxu0 0.0
    %226 = vmatprep.subr.mxu0 0.0
    %227 = vmatpush1.msra.mxu0 0.0
    %228 = vmatprep.subr.mxu0 0.0
    %229 = vmatpush1.msra.mxu0 0.0
    %230 = vmatprep.subr.mxu0 0.0
    %231 = vmatpush1.msra.mxu0 0.0
    %232 = vmatprep.subr.mxu0 0.0
    %233 = vmatpush1.msra.mxu0 0.0
    %234 = vmatprep.subr.mxu0 0.0
    %235 = vmatpush1.msra.mxu0 0.0
    %236 = vmatprep.subr.mxu0 0.0
    %237 = vmatpush1.msra.mxu0 0.0
    %238 = vmatprep.subr.mxu0 0.0
    %239 = vmatpush1.msra.mxu0 0.0
    %240 = vmatprep.subr.mxu0 0.0
    %241 = vmatpush1.msra.mxu0 0.0
    %242 = vmatprep.subr.mxu0 0.0
    %243 = vmatpush1.msra.mxu0 0.0
    %244 = vmatprep.subr.mxu0 0.0
    %245 = vmatpush1.msra.mxu0 0.0
    %246 = vmatprep.subr.mxu0 0.0
    %247 = vmatpush1.msra.mxu0 0.0
    %248 = vmatprep.subr.mxu0 0.0
    %249 = vmatpush1.msra.mxu0 0.0
    %250 = vmatprep.mubr.f32.mxu0 0.0
    %251 = vmatmul.mubr.f32.gmra.mrb[0].mxu0 %v182
    %v252 = vpop.f32.mrb[0].mxu0
    %v253 = vadd.f32 %v180, %v252
    %v254 = vpop.f32.mrb[0].mxu0
    %255 = vmatprep.mubr.f32.mxu0 0.0
    %256 = vmatmul.mubr.f32.gmra.mrb[0].mxu0 %v184
    %v257 = vpop.f32.mrb[0].mxu0
    %v258 = vadd.f32 %v180, %v257
    %v259 = vpop.f32.mrb[0].mxu0
    %260 = vdwg.mxu0
    %v261 = vtanh.pop %v253
    %v262 = vtanh.pop %v258
    %v263 = vld [vmem:[%s6] sm:$0x1]
    %v265 = vlaneseq
    %v266 = vshrl.u32 %v265, 7
    %v267 = vsub.s32 0, %v266
    %v268 = vrot.slane %v263, %v267
    %v270 = vmul.f32 %v261, %v268
    %v271 = vmul.f32 %v262, %v268
    %v274 = vcombine.high %v270, %v270
    %v276 = vunpack.c.l.s4 1983009808
    %v277 = vunpack.c.0.s8 %v276
    %v278 = vlaneseq
    %v279 = vshrl.u32 %v278, 7
    %v280 = vsub.s32 %v277, %v279
    %v281 = vrot.slane %v270, %v280
    %v283 = vunpack.c.l.s4 1983009808
    %v284 = vunpack.c.0.s8 %v283
    %v285 = vlaneseq
    %v286 = vshrl.u32 %v285, 7
    %v287 = vsub.s32 %v284, %v286
    %v288 = vrot.slane %v274, %v287
    %v289 = vcombine.high %v281, %v281
    %v290 = vcombine.high %v288, %v288
    %v291 = vcombine.high %v271, %v271
    %v293 = vunpack.c.l.s4 1983009808
    %v294 = vunpack.c.0.s8 %v293
    %v295 = vlaneseq
    %v296 = vshrl.u32 %v295, 7
    %v297 = vsub.s32 %v294, %v296
    %v298 = vrot.slane %v271, %v297
    %v300 = vunpack.c.l.s4 1983009808
    %v301 = vunpack.c.0.s8 %v300
    %v302 = vlaneseq
    %v303 = vshrl.u32 %v302, 7
    %v304 = vsub.s32 %v301, %v303
    %v305 = vrot.slane %v291, %v304
    %v306 = vcombine.high %v298, %v298
    %v307 = vcombine.high %v305, %v305
    %vm316 = vcmask 123904
    %v317 = vsel %vm316, %v281, 0.0
    %318 = vadd.xlane.f32.xlu0 %v317
    %v319 = vpop.xlane.xlu0 %318
    %v320 = vsel %vm316, %v289, 0.0
    %321 = vadd.xlane.f32.xlu0 %v320
    %v322 = vpop.xlane.xlu0 %321
    %v323 = vsel %vm316, %v288, 0.0
    %324 = vadd.xlane.f32.xlu0 %v323
    %v325 = vpop.xlane.xlu0 %324
    %v326 = vsel %vm316, %v290, 0.0
    %327 = vadd.xlane.f32.xlu0 %v326
    %v328 = vpop.xlane.xlu0 %327
    %v329 = vsel %vm316, %v298, 0.0
    %330 = vadd.xlane.f32.xlu0 %v329
    %v331 = vpop.xlane.xlu0 %330
    %v332 = vsel %vm316, %v306, 0.0
    %333 = vadd.xlane.f32.xlu0 %v332
    %v334 = vpop.xlane.xlu0 %333
    %v335 = vsel %vm316, %v305, 0.0
    %336 = vadd.xlane.f32.xlu0 %v335
    %v337 = vpop.xlane.xlu0 %336
    %v338 = vsel %vm316, %v307, 0.0
    %339 = vadd.xlane.f32.xlu0 %v338
    %v340 = vpop.xlane.xlu0 %339
    %s341 = sld [smem:[#allocation2]]
    %v342 = vstv %s341
    %v343 = vadd.f32 %v319, %v342
    %v344 = vadd.f32 %v322, %v342
    %v345 = vadd.f32 %v325, %v342
    %v346 = vadd.f32 %v328, %v342
    %v347 = vadd.f32 %v331, %v342
    %v348 = vadd.f32 %v334, %v342
    %v349 = vadd.f32 %v337, %v342
    %v350 = vadd.f32 %v340, %v342
    %v351 = vld [vmem:[%s1] sm:$0xff]
    %vm352 = vcmp.ne.f32.partialorder %v351, 0.0
    %v361 = vlaneseq
    %v362 = vand.u32 %v361, 127
    %v363 = vlaneseq
    %v364 = vshrl.u32 %v363, 7
    %v365 = vsub.s32 %v362, %v364
    %v366 = vrot.slane %v343, %v365
    %v367 = vlaneseq
    %v368 = vshrl.u32 %v367, 7
    %v369 = vsub.s32 %v362, %v368
    %v370 = vrot.slane %v344, %v369
    %v371 = vlaneseq
    %v372 = vshrl.u32 %v371, 7
    %v373 = vsub.s32 %v362, %v372
    %v374 = vrot.slane %v345, %v373
    %v375 = vlaneseq
    %v376 = vshrl.u32 %v375, 7
    %v377 = vsub.s32 %v362, %v376
    %v378 = vrot.slane %v346, %v377
    %v379 = vlaneseq
    %v380 = vshrl.u32 %v379, 7
    %v381 = vsub.s32 %v362, %v380
    %v382 = vrot.slane %v347, %v381
    %v383 = vlaneseq
    %v384 = vshrl.u32 %v383, 7
    %v385 = vsub.s32 %v362, %v384
    %v386 = vrot.slane %v348, %v385
    %v387 = vlaneseq
    %v388 = vshrl.u32 %v387, 7
    %v389 = vsub.s32 %v362, %v388
    %v390 = vrot.slane %v349, %v389
    %v391 = vlaneseq
    %v392 = vshrl.u32 %v391, 7
    %v393 = vsub.s32 %v362, %v392
    %v394 = vrot.slane %v350, %v393
    %vm395 = vcmask 1041409
    %v396 = vsel %vm395, %v370, %v366
    %vm397 = vcmask 1042434
    %v398 = vsel %vm397, %v374, %v396
    %vm399 = vcmask 1043459
    %v400 = vsel %vm399, %v378, %v398
    %vm401 = vcmask 1044484
    %v402 = vsel %vm401, %v382, %v400
    %vm403 = vcmask 1045509
    %v404 = vsel %vm403, %v386, %v402
    %vm405 = vcmask 1046534
    %v406 = vsel %vm405, %v390, %v404
    %vm407 = vcmask 1047559
    %v408 = vsel %vm407, %v394, %v406
    %v410 = vsel %vm352, %v408, -1e+10
    %vm411 = vcmask 15360
    %v412 = vsel %vm411, %v410, -inf
    %v413 = vrot.slane %v412, 4
    %v414 = vmax.f32 %v412, %v413
    %v415 = vrot.slane %v414, 2
    %v416 = vmax.f32 %v414, %v415
    %v417 = vrot.slane %v416, 1
    %v418 = vmax.f32 %v416, %v417
    %v419 = vsub.f32 %v410, %v418
    %v420 = vmul.f32 %v419, 1.442695
    %v421 = vpow.pop %v420
    %v422 = vsel %vm411, %v421, 0.0
    %v423 = vrot.slane %v422, 4
    %v424 = vadd.f32 %v422, %v423
    %v425 = vrot.slane %v424, 2
    %v426 = vadd.f32 %v424, %v425
    %v427 = vrot.slane %v426, 1
    %v428 = vadd.f32 %v426, %v427
    %v429 = vrcp.pop %v428
    %v430 = vmul.f32 %v421, %v429
    %v431 = vlaneseq
    %v432 = vshrl.u32 %v431, 7
    %v433 = vsub.s32 0, %v432
    %v434 = vrot.slane %v430, %v433
    %436 = vbcast.lane.b32.xlu0 %v434, 256
    %v437 = vpop.permute.xlu0 %436
    %v438 = vlaneseq
    %v439 = vshrl.u32 %v438, 7
    %v440 = vsub.s32 1, %v439
    %v441 = vrot.slane %v430, %v440
    %443 = vbcast.lane.b32.xlu0 %v441, 256
    %v444 = vpop.permute.xlu0 %443
    %v445 = vlaneseq
    %v446 = vshrl.u32 %v445, 7
    %v447 = vsub.s32 2, %v446
    %v448 = vrot.slane %v430, %v447
    %450 = vbcast.lane.b32.xlu0 %v448, 256
    %v451 = vpop.permute.xlu0 %450
    %v452 = vlaneseq
    %v453 = vshrl.u32 %v452, 7
    %v454 = vsub.s32 3, %v453
    %v455 = vrot.slane %v430, %v454
    %457 = vbcast.lane.b32.xlu0 %v455, 256
    %v458 = vpop.permute.xlu0 %457
    %v459 = vlaneseq
    %v460 = vshrl.u32 %v459, 7
    %v461 = vsub.s32 4, %v460
    %v462 = vrot.slane %v430, %v461
    %464 = vbcast.lane.b32.xlu0 %v462, 256
    %v465 = vpop.permute.xlu0 %464
    %v466 = vlaneseq
    %v467 = vshrl.u32 %v466, 7
    %v468 = vsub.s32 5, %v467
    %v469 = vrot.slane %v430, %v468
    %471 = vbcast.lane.b32.xlu0 %v469, 256
    %v472 = vpop.permute.xlu0 %471
    %v473 = vlaneseq
    %v474 = vshrl.u32 %v473, 7
    %v475 = vsub.s32 6, %v474
    %v476 = vrot.slane %v430, %v475
    %478 = vbcast.lane.b32.xlu0 %v476, 256
    %v479 = vpop.permute.xlu0 %478
    %v480 = vlaneseq
    %v481 = vshrl.u32 %v480, 7
    %v482 = vsub.s32 7, %v481
    %v483 = vrot.slane %v430, %v482
    %485 = vbcast.lane.b32.xlu0 %v483, 256
    %v486 = vpop.permute.xlu0 %485
    %v487 = vmul.f32 %v31, %v437
    %v488 = vmul.f32 %v32, %v444
    %v489 = vmul.f32 %v33, %v451
    %v490 = vmul.f32 %v34, %v458
    %v491 = vmul.f32 %v35, %v465
    %v492 = vmul.f32 %v36, %v472
    %v493 = vmul.f32 %v37, %v479
    %v494 = vmul.f32 %v38, %v486
    %vm495 = vcmask 254976
    %v496 = vsel %vm495, %v487, 0.0
    %v497 = vsel %vm495, %v488, 0.0
    %v498 = vadd.f32 %v496, %v497
    %v499 = vsel %vm495, %v489, 0.0
    %v500 = vadd.f32 %v498, %v499
    %v501 = vsel %vm495, %v490, 0.0
    %v502 = vadd.f32 %v500, %v501
    %v503 = vsel %vm495, %v491, 0.0
    %v504 = vadd.f32 %v502, %v503
    %v505 = vsel %vm495, %v492, 0.0
    %v506 = vadd.f32 %v504, %v505
    %v507 = vsel %vm495, %v493, 0.0
    %v508 = vadd.f32 %v506, %v507
    %v509 = vsel %vm495, %v494, 0.0
    %v510 = vadd.f32 %v508, %v509
    %511 = vst.msk [vmem:[#allocation3] sm:$0x3] %vm495, %v510
    // Predicated region
    $region34: #{tpu_custom_call.1} parent=1 // pred_check
      _
    $region35: #{tpu_custom_call.1} parent=1 // pred_check_branch
      %513 = sbr.rel (0) target = $region37
    $region36: #{tpu_custom_call.1} parent=1 // pred_region
      %s515 = ssub.s32 32, 32
      %516 = vsyncadd [#allocation4], %s515
      %s518 = sshll.u32 [#allocation3], 4
      %s519 = int_to_ptr.vmem [resolvable:$true] %s518
      %521 = dma.vmem_to_hbm [thread:$0]  %s519, 32, %s8, [#allocation4]
    $region37: #{tpu_custom_call.1} parent=1 // pred_fallthru
      _
    // Predicated region
    $region38: #{tpu_custom_call.1} parent=1 // pred_check
      _
    $region39: #{tpu_custom_call.1} parent=1 // pred_check_branch
      %523 = sbr.rel (0) target = $region41
    $region40: #{tpu_custom_call.1} parent=1 // pred_region
      %524 = dma.done [#allocation4], 32
    $region41: #{tpu_custom_call.1} parent=1 // pred_fallthru
      _
    %525 = vsyncpa [#allocation4], 1

</llo_original>
